<compile_context>
chip_gen: v6e
topology: v6e:2x2x1
jax: 0.10.0
libtpu: 0.0.40
codegen_flags: <defaults>
</compile_context>

<pallas_src>
import functools

import jax
import jax.numpy as jnp
from jax import lax
from jax.experimental import pallas as pl
from jax.experimental.pallas import tpu as pltpu

_LANES = 128
_SUBLANES = 8


def _sigmoid_flow_kernel(x_ref, out_ref, logdet_ref, acc_ref, *,
                         n_valid, tile_rows, mask_needed):
    j = pl.program_id(1)
    n_tiles = pl.num_programs(1)

    x = x_ref[...].astype(jnp.float32)            # (1, tile_rows, 128)
    ax = jnp.abs(x)
    t = jnp.exp(-ax)                              # single EUP exp per element
    one_plus_t = 1.0 + t

    # sigmoid(x): x>=0 -> 1/(1+t);  x<0 -> t/(1+t)
    # approx EUP reciprocal + 2 VPU Newton steps -> f32-accurate, EUP-light.
    r = pl.reciprocal(one_plus_t, approx=True)
    r = r * (2.0 - one_plus_t * r)
    r = r * (2.0 - one_plus_t * r)
    sig = jnp.where(x >= 0.0, 1.0, t) * r
    out_ref[...] = sig.astype(out_ref.dtype)

    # softplus(x) + softplus(-x) = |x| + 2*log(1 + exp(-|x|))
    sp = ax + 2.0 * jnp.log(one_plus_t)

    if mask_needed:
        # zero the contribution of zero-padded feature slots (each would add
        # 2*ln(2) to the sum otherwise).
        row = lax.broadcasted_iota(jnp.int32, sp.shape, 1)
        lane = lax.broadcasted_iota(jnp.int32, sp.shape, 2)
        flat = (j * tile_rows + row) * _LANES + lane
        sp = jnp.where(flat < n_valid, sp, 0.0)

    @pl.when(j == 0)
    def _():
        acc_ref[...] = jnp.zeros_like(acc_ref)

    # lane/sublane-aligned accumulation: pure VPU adds, no per-tile XLU reduce.
    acc_ref[...] += jnp.sum(
        sp.reshape(tile_rows // _SUBLANES, _SUBLANES, _LANES), axis=0)

    @pl.when(j == n_tiles - 1)
    def _():
        # one cross-sublane reduce per batch; write lane-dense (128) partials.
        lane_partials = jnp.sum(acc_ref[...], axis=0, keepdims=True)  # (1,128)
        logdet_ref[...] = (-lane_partials).reshape(1, 1, _LANES)


def sigmoid_flow_forward(x, target_block_rows=4096):
    """x: (B, ...) float array -> (sigmoid(x), logdet of shape (B,))."""
    B = x.shape[0]
    N = 1
    for d in x.shape[1:]:
        N *= d

    # Pad the flattened feature axis so it packs densely onto (sublane, lane).
    chunk = _SUBLANES * _LANES
    rows = ((N + chunk - 1) // chunk) * _SUBLANES         # multiple of 8

    # Balance tiles across the grid (minimizes row padding vs. a fixed tile).
    n_tiles = max(1, (rows + target_block_rows - 1) // target_block_rows)
    tile_rows = (rows + n_tiles - 1) // n_tiles
    tile_rows = ((tile_rows + _SUBLANES - 1) // _SUBLANES) * _SUBLANES
    rows_pad = n_tiles * tile_rows
    n_pad = rows_pad * _LANES

    x2 = x.reshape(B, N)
    if n_pad != N:
        x2 = jnp.pad(x2, ((0, 0), (0, n_pad - N)))
    x3 = x2.reshape(B, rows_pad, _LANES)

    kernel = functools.partial(
        _sigmoid_flow_kernel,
        n_valid=N, tile_rows=tile_rows, mask_needed=(n_pad != N))

    out3, logdet3 = pl.pallas_call(
        kernel,
        out_shape=(
            jax.ShapeDtypeStruct((B, rows_pad, _LANES), x.dtype),
            jax.ShapeDtypeStruct((B, 1, _LANES), jnp.float32),
        ),
        grid_spec=pltpu.PrefetchScalarGridSpec(
            num_scalar_prefetch=0,
            grid=(B, n_tiles),
            in_specs=[
                pl.BlockSpec((1, tile_rows, _LANES), lambda b, j: (b, j, 0)),
            ],
            out_specs=[
                pl.BlockSpec((1, tile_rows, _LANES), lambda b, j: (b, j, 0)),
                pl.BlockSpec((1, 1, _LANES), lambda b, j: (b, 0, 0)),
            ],
            scratch_shapes=[pltpu.VMEM((_SUBLANES, _LANES), jnp.float32)],
        ),
        compiler_params=pltpu.CompilerParams(
            dimension_semantics=("parallel", "arbitrary"),
        ),
    )(x3)

    out = out3.reshape(B, n_pad)[:, :N].reshape(x.shape)
    logdet = jnp.sum(logdet3[:, 0, :], axis=-1)           # (B,)
    return out, logdet


def _reference(x):
    out = jax.nn.sigmoid(x)
    sp = jnp.logaddexp(0.0, x) + jnp.logaddexp(0.0, -x)
    logdet = -jnp.sum(sp.reshape(x.shape[0], -1), axis=1)
    return out, logdet


# TODO(synk): SigmoidFlow.reverse() (inverse pass) is not implemented here; this
# kernel covers the forward pass only.

if __name__ == "__main__":
    key = jax.random.PRNGKey(0)
    x = jax.random.normal(key, (2, 4, 16, 16), dtype=jnp.float32)

    out, logdet = sigmoid_flow_forward(x)
    out = jax.block_until_ready(out)
    logdet = jax.block_until_ready(logdet)

    out_ref, logdet_ref = _reference(x)
    assert out.shape == (2, 4, 16, 16) and logdet.shape == (2,)
    assert jnp.allclose(out, out_ref, atol=1e-5, rtol=1e-5)
    assert jnp.allclose(logdet, logdet_ref, atol=1e-3, rtol=1e-5)

    print("KERNEL_OK")
</pallas_src>

<mosaic_0001>
module attributes {stable_mosaic.version = 11 : i64} {
  func.func @_sigmoid_flow_kernel(%arg0: i32, %arg1: i32, %arg2: memref<1x8x128xf32, #tpu.memory_space<vmem>>, %arg3: memref<1x8x128xf32, #tpu.memory_space<vmem>>, %arg4: memref<1x1x128xf32, #tpu.memory_space<vmem>>, %arg5: memref<8x128xf32, #tpu.memory_space<vmem>>) attributes {dimension_semantics = [#tpu.dimension_semantics<parallel>, #tpu.dimension_semantics<arbitrary>], iteration_bounds = array<i64: 2, 1>, scalar_prefetch = 0 : i64, scratch_operands = 1 : i64, tpu.core_type = #tpu.core_type<tc>, window_params = [{transform_indices = @transform_0, window_bounds = array<i64: 1, 8, 128>}, {transform_indices = @transform_1, window_bounds = array<i64: 1, 8, 128>}, {transform_indices = @transform_2, window_bounds = array<i64: 1, 1, 128>}]} {
    %c0 = arith.constant 0 : index
    %c0_0 = arith.constant 0 : index
    %c0_1 = arith.constant 0 : index
    %0 = vector.load %arg2[%c0, %c0_0, %c0_1] : memref<1x8x128xf32, #tpu.memory_space<vmem>>, vector<1x8x128xf32>
    %1 = math.absf %0 : vector<1x8x128xf32>
    %cst = arith.constant 0.000000e+00 : f32
    %2 = vector.broadcast %cst : f32 to vector<1x8x128xf32>
    %3 = arith.subf %2, %1 : vector<1x8x128xf32>
    %4 = math.exp %3 : vector<1x8x128xf32>
    %cst_2 = arith.constant 1.000000e+00 : f32
    %5 = vector.broadcast %cst_2 : f32 to vector<1x8x128xf32>
    %6 = arith.addf %5, %4 : vector<1x8x128xf32>
    %7 = tpu.reciprocal %6 {approx = true} : vector<1x8x128xf32> -> vector<1x8x128xf32>
    %8 = arith.mulf %6, %7 : vector<1x8x128xf32>
    %cst_3 = arith.constant 2.000000e+00 : f32
    %9 = vector.broadcast %cst_3 : f32 to vector<1x8x128xf32>
    %10 = arith.subf %9, %8 : vector<1x8x128xf32>
    %11 = arith.mulf %7, %10 : vector<1x8x128xf32>
    %12 = arith.mulf %6, %11 : vector<1x8x128xf32>
    %cst_4 = arith.constant 2.000000e+00 : f32
    %13 = vector.broadcast %cst_4 : f32 to vector<1x8x128xf32>
    %14 = arith.subf %13, %12 : vector<1x8x128xf32>
    %15 = arith.mulf %11, %14 : vector<1x8x128xf32>
    %cst_5 = arith.constant 0.000000e+00 : f32
    %16 = vector.broadcast %cst_5 : f32 to vector<1x8x128xf32>
    %17 = arith.cmpf oge, %0, %16 : vector<1x8x128xf32>
    %cst_6 = arith.constant 1.000000e+00 : f32
    %18 = vector.broadcast %cst_6 : f32 to vector<1x8x128xf32>
    %19 = arith.select %17, %18, %4 : vector<1x8x128xi1>, vector<1x8x128xf32>
    %20 = arith.mulf %19, %15 : vector<1x8x128xf32>
    %c0_7 = arith.constant 0 : index
    %c0_8 = arith.constant 0 : index
    %c0_9 = arith.constant 0 : index
    %21 = vector.load %arg3[%c0_7, %c0_8, %c0_9] : memref<1x8x128xf32, #tpu.memory_space<vmem>>, vector<1x8x128xf32>
    tpu.vector_store %arg3[%c0_7, %c0_8, %c0_9], %20 {strides = array<i32>} : memref<1x8x128xf32, #tpu.memory_space<vmem>>, vector<1x8x128xf32>,
    %22 = math.log %6 : vector<1x8x128xf32>
    %cst_10 = arith.constant 2.000000e+00 : f32
    %23 = vector.broadcast %cst_10 : f32 to vector<1x8x128xf32>
    %24 = arith.mulf %23, %22 : vector<1x8x128xf32>
    %25 = arith.addf %1, %24 : vector<1x8x128xf32>
    %c0_i32 = arith.constant 0 : i32
    %26 = arith.cmpi eq, %arg1, %c0_i32 : i32
    %27 = arith.extui %26 : i1 to i32
    %c0_i32_11 = arith.constant 0 : i32
    %28 = arith.cmpi ne, %27, %c0_i32_11 : i32
    scf.if %28 {
      %cst_19 = arith.constant 0.000000e+00 : f32
      %36 = vector.broadcast %cst_19 : f32 to vector<8x128xf32>
      %c0_20 = arith.constant 0 : index
      %c0_21 = arith.constant 0 : index
      %37 = vector.load %arg5[%c0_20, %c0_21] : memref<8x128xf32, #tpu.memory_space<vmem>>, vector<8x128xf32>
      tpu.vector_store %arg5[%c0_20, %c0_21], %36 {strides = array<i32>} : memref<8x128xf32, #tpu.memory_space<vmem>>, vector<8x128xf32>,
    } else {
    }
    %c0_12 = arith.constant 0 : index
    %c0_13 = arith.constant 0 : index
    %29 = vector.load %arg5[%c0_12, %c0_13] : memref<8x128xf32, #tpu.memory_space<vmem>>, vector<8x128xf32>
    %cst_14 = arith.constant dense<0.000000e+00> : vector<8x128xf32>
    %30 = vector.multi_reduction <add>, %25, %cst_14 [0] : vector<1x8x128xf32> to vector<8x128xf32>
    %31 = arith.addf %29, %30 : vector<8x128xf32>
    %c0_15 = arith.constant 0 : index
    %c0_16 = arith.constant 0 : index
    %32 = vector.load %arg5[%c0_15, %c0_16] : memref<8x128xf32, #tpu.memory_space<vmem>>, vector<8x128xf32>
    tpu.vector_store %arg5[%c0_15, %c0_16], %31 {strides = array<i32>} : memref<8x128xf32, #tpu.memory_space<vmem>>, vector<8x128xf32>,
    %c0_i32_17 = arith.constant 0 : i32
    %33 = arith.cmpi eq, %arg1, %c0_i32_17 : i32
    %34 = arith.extui %33 : i1 to i32
    %c0_i32_18 = arith.constant 0 : i32
    %35 = arith.cmpi ne, %34, %c0_i32_18 : i32
    scf.if %35 {
      %c0_19 = arith.constant 0 : index
      %c0_20 = arith.constant 0 : index
      %36 = vector.load %arg5[%c0_19, %c0_20] : memref<8x128xf32, #tpu.memory_space<vmem>>, vector<8x128xf32>
      %cst_21 = arith.constant dense<0.000000e+00> : vector<128xf32>
      %37 = vector.multi_reduction <add>, %36, %cst_21 [0] : vector<8x128xf32> to vector<128xf32>
      %38 = vector.shape_cast %37 : vector<128xf32> to vector<1x128xf32>
      %cst_22 = arith.constant 0.000000e+00 : f32
      %39 = vector.broadcast %cst_22 : f32 to vector<1x128xf32>
      %40 = arith.subf %39, %38 : vector<1x128xf32>
      %41 = vector.shape_cast %40 : vector<1x128xf32> to vector<1x1x128xf32>
      %c0_23 = arith.constant 0 : index
      %c0_24 = arith.constant 0 : index
      %c0_25 = arith.constant 0 : index
      %42 = vector.load %arg4[%c0_23, %c0_24, %c0_25] : memref<1x1x128xf32, #tpu.memory_space<vmem>>, vector<1x1x128xf32>
      tpu.vector_store %arg4[%c0_23, %c0_24, %c0_25], %41 {strides = array<i32>} : memref<1x1x128xf32, #tpu.memory_space<vmem>>, vector<1x1x128xf32>,
    } else {
    }
    return
  }
  func.func @transform_0(%arg0: i32, %arg1: i32) -> (i32, i32, i32) {
    %c0_i32 = arith.constant 0 : i32
    %c0_i32_0 = arith.constant 0 : i32
    return %arg0, %arg1, %c0_i32 : i32, i32, i32
  }
  func.func @transform_1(%arg0: i32, %arg1: i32) -> (i32, i32, i32) {
    %c0_i32 = arith.constant 0 : i32
    %c0_i32_0 = arith.constant 0 : i32
    return %arg0, %arg1, %c0_i32 : i32, i32, i32
  }
  func.func @transform_2(%arg0: i32, %arg1: i32) -> (i32, i32, i32) {
    %c0_i32 = arith.constant 0 : i32
    %c0_i32_0 = arith.constant 0 : i32
    %c0_i32_1 = arith.constant 0 : i32
    return %arg0, %c0_i32, %c0_i32_0 : i32, i32, i32
  }
}

</mosaic_0001>

<llo_original>
// kernel: tpu_custom_call.1
$region0: #{tpu_custom_call.1}
  #allocation0 [shape = 'u32[]', space=smem, size = 0x4, offset = 0x4, fixed_abs, tag = 'smem constant byte address 0x4 - core index']
  #allocation1 [shape = 'u32[144,128]{1,0:T(1,128)}', space=vmem, size = 0x12000, scoped, tag = 'internal scratch']
  #allocation2 [shape = 'f32[8,128]{1,0:T(8,128)}', space=vmem, size = 0x1000, scoped, tag = 'scratch operand']
  %s0 = inlined_call_operand.hbm [shape: f32[2,8,128], index: 0, kind: input, shape index: {}]
  %s1 = inlined_call_operand.hbm [shape: f32[2,8,128], index: 1, kind: output, shape index: {0}]
  %s2 = inlined_call_operand.hbm [shape: f32[2,1,128], index: 2, kind: output, shape index: {1}]
  %3 = xla_tuple %s1, %s2
  %s4 = sld [smem:[#allocation0]]
  $region57: #{tpu_custom_call.1} parent=0
    _
  %s6 = ssub.s32 1, %s4
  %s7 = scalar_select 0, %s6, %s4
  $region1: #{tpu_custom_call.1} parent=0
    #allocation3 [shape = 'u8[8192]{0}', space=vmem, size = 0x2000, scoped, tag = 'input window, operand 0']
    #allocation4 [shape = 's32[2]{0}', space=sflag, size = 0x8, scoped, tag = 'scoped memory for tpu_custom_call.1']
    #allocation5 [shape = 's32[2]{0}', space=sflag, size = 0x8, scoped, tag = 'scoped memory for tpu_custom_call.1']
    #allocation6 [shape = 'u8[8192]{0}', space=vmem, size = 0x2000, scoped, tag = 'output window, operand 0']
    #allocation7 [shape = 'u8[1024]{0}', space=vmem, size = 0x400, scoped, tag = 'output window, operand 1']
    #allocation8 [shape = 's32[2]{0}', space=sflag, size = 0x8, scoped, tag = 'scoped memory for tpu_custom_call.1']
    %8 = vsyncpa [#allocation4], 0
    %s9 = scalar_lea.sflag [#allocation4], 1
    %10 = vsyncpa %s9, 0
    %11 = vsyncpa [#allocation5], 0
    %s12 = scalar_lea.sflag [#allocation5], 1
    %13 = vsyncpa %s12, 0
    %14 = vsyncpa [#allocation8], 0
    %s15 = scalar_lea.sflag [#allocation8], 1
    %16 = vsyncpa %s15, 0
    loop: start=0, step=1, limit=4
    $region2: #{tpu_custom_call.1} parent=1 // loop_pre_header
      _
    $region3: #{tpu_custom_call.1} parent=1 // loop_header
      %s18 = sphi 0, %s22
      %p19 = scmp.ge.s32.totalorder %s18, 4
      %s25 = sphi 0, %s37
      %s26 = sphi 0, %s33
      %s27 = sphi 0, %s25
      %s28 = sphi 0, %s26
      %s29 = sphi 0, %s27
      %s30 = sphi 0, %s28
      %s42 = sphi 0, %s44
      %s45 = sphi 0, %s42
      %s46 = sphi 0, %s45
      %s62 = sphi 0, %s46
      %s70 = sphi 0, %s72
      %s73 = sphi 0, %s70
      %s74 = sphi 0, %s73
      %s90 = sphi 0, %s74
      %s96 = sphi 0, %s98
      %s99 = sphi 0, %s96
      %s100 = sphi 0, %s99
      %s116 = sphi 0, %s100
    $region4: #{tpu_custom_call.1} parent=1 // loop_header_branch
      %21 = sbr.rel (%p19) target = $region8
    $region5: #{tpu_custom_call.1} parent=1 // loop_body
      %s23 = ssub.s32 %s18, 1
      %s24 = ssub.s32 %s18, 2
      %s31 = sadd.s32 1, %s26
      %p32 = scmp.ge.s32.totalorder %s31, 1
      %s33 = scalar_select %p32, 0, %s31
      %s34 = sadd.s32 1, %s25
      %s35 = scalar_select %p32, %s34, %s25
      %p36 = scmp.ge.s32.totalorder %s35, 2
      %s37 = scalar_select %p36, 0, %s35
      %s38 = ssub.s32 %s25, %s37
      %s39 = ssub.s32 %s26, %s33
      %s40 = sor.u32 %s38, %s39
      %p41 = scmp.eq.s32.totalorder %s40, 0
      %s43 = sadd.s32 %s42, 1
      %s44 = scalar_select %p41, %s42, %s43
      %p47 = pneg %p41
      %p48 = scmp.eq.s32.totalorder %s18, 1
      %p49 = por %p47, %p48
      %p50 = scmp.ne.s32.totalorder %s42, %s45
      %p51 = scmp.eq.s32.totalorder %s18, 0
      %p52 = por %p50, %p51
      %p53 = scmp.ne.s32.totalorder %s42, %s45
      %p54 = scmp.eq.s32.totalorder %s23, 1
      %p55 = por %p53, %p54
      %p56 = scmp.ne.s32.totalorder %s45, %s46
      %p57 = scmp.eq.s32.totalorder %s23, 0
      %p58 = por %p56, %p57
      %p59 = scmp.ne.s32.totalorder %s45, %s46
      %p60 = scmp.eq.s32.totalorder %s24, 1
      %p61 = por %p59, %p60
      %p63 = scmp.ne.s32.totalorder %s46, %s62
      %p64 = scmp.eq.s32.totalorder %s24, 0
      %p65 = por %p63, %p64
      %s66 = ssub.s32 %s25, %s37
      %s67 = ssub.s32 %s26, %s33
      %s68 = sor.u32 %s66, %s67
      %p69 = scmp.eq.s32.totalorder %s68, 0
      %s71 = sadd.s32 %s70, 1
      %s72 = scalar_select %p69, %s70, %s71
      %p75 = pneg %p69
      %p76 = scmp.eq.s32.totalorder %s18, 1
      %p77 = por %p75, %p76
      %p78 = scmp.ne.s32.totalorder %s70, %s73
      %p79 = scmp.eq.s32.totalorder %s18, 0
      %p80 = por %p78, %p79
      %p81 = scmp.ne.s32.totalorder %s70, %s73
      %p82 = scmp.eq.s32.totalorder %s23, 1
      %p83 = por %p81, %p82
      %p84 = scmp.ne.s32.totalorder %s73, %s74
      %p85 = scmp.eq.s32.totalorder %s23, 0
      %p86 = por %p84, %p85
      %p87 = scmp.ne.s32.totalorder %s73, %s74
      %p88 = scmp.eq.s32.totalorder %s24, 1
      %p89 = por %p87, %p88
      %p91 = scmp.ne.s32.totalorder %s74, %s90
      %p92 = scmp.eq.s32.totalorder %s24, 0
      %p93 = por %p91, %p92
      %s94 = ssub.s32 %s25, %s37
      %p95 = scmp.eq.s32.totalorder %s94, 0
      %s97 = sadd.s32 %s96, 1
      %s98 = scalar_select %p95, %s96, %s97
      %p101 = pneg %p95
      %p102 = scmp.eq.s32.totalorder %s18, 1
      %p103 = por %p101, %p102
      %p104 = scmp.ne.s32.totalorder %s96, %s99
      %p105 = scmp.eq.s32.totalorder %s18, 0
      %p106 = por %p104, %p105
      %p107 = scmp.ne.s32.totalorder %s96, %s99
      %p108 = scmp.eq.s32.totalorder %s23, 1
      %p109 = por %p107, %p108
      %p110 = scmp.ne.s32.totalorder %s99, %s100
      %p111 = scmp.eq.s32.totalorder %s23, 0
      %p112 = por %p110, %p111
      %p113 = scmp.ne.s32.totalorder %s99, %s100
      %p114 = scmp.eq.s32.totalorder %s24, 1
      %p115 = por %p113, %p114
      %p117 = scmp.ne.s32.totalorder %s100, %s116
      %p118 = scmp.eq.s32.totalorder %s24, 0
      %p119 = por %p117, %p118
      %p120 = scmp.le.s32.totalorder 1, %s18
      %p121 = scmp.lt.s32.totalorder %s18, 3
      %p122 = pnand %p120, %p121
      %p123 = pneg %p122
      // Predicated region
      $region9: #{tpu_custom_call.1} parent=5 // pred_check
        _
      $region10: #{tpu_custom_call.1} parent=5 // pred_check_branch
        %125 = sbr.rel (%p122) target = $region12
      $region11: #{tpu_custom_call.1} parent=5 // pred_region
        %s126 = ssub.s32 %s18, 1
      $region12: #{tpu_custom_call.1} parent=5 // pred_fallthru
        _
      %p127 = scmp.lt.s32.totalorder %s18, 2
      // Predicated region
      $region13: #{tpu_custom_call.1} parent=5 // pred_check
        %p128 = pneg %p127
      $region14: #{tpu_custom_call.1} parent=5 // pred_check_branch
        %130 = sbr.rel (%p128) target = $region16
      $region15: #{tpu_custom_call.1} parent=5 // pred_region
        // Predicated region
        $region17: #{tpu_custom_call.1} parent=15 // pred_check
          %p131 = pneg %p52
        $region18: #{tpu_custom_call.1} parent=15 // pred_check_branch
          %133 = sbr.rel (%p131) target = $region20
        $region19: #{tpu_custom_call.1} parent=15 // pred_region
          %s134 = sand.u32 %s42, 1
          %s135 = scalar_lea.sflag [#allocation4], %s134
          %s136 = sand.u32 %s42, 1
          %s137 = smul.addr %s136, 8
          %s138 = scalar_lea.vmem [#allocation3], %s137
          %s140 = ssub.s32 128, 128
          %141 = vsyncadd %s135, %s140
          %s142 = sadd.s32 %s26, %s25
          %s143 = smul.addr %s142, 128
          %s144 = scalar_lea.hbm %s0, %s143
          %s146 = sshll.u32 %s138, 4
          %s147 = int_to_ptr.vmem [resolvable:$true] %s146
          %149 = dma.hbm_to_vmem [thread:$0]  %s144, 128, %s147, %s135
        $region20: #{tpu_custom_call.1} parent=15 // pred_fallthru
          _
      $region16: #{tpu_custom_call.1} parent=5 // pred_fallthru
        _
      %p150 = scmp.le.s32.totalorder 1, %s18
      %p151 = scmp.lt.s32.totalorder %s18, 3
      %p152 = pnand %p150, %p151
      %p153 = pneg %p152
      // Predicated region
      $region21: #{tpu_custom_call.1} parent=5 // pred_check
        _
      $region22: #{tpu_custom_call.1} parent=5 // pred_check_branch
        %155 = sbr.rel (%p152) target = $region24
      $region23: #{tpu_custom_call.1} parent=5 // pred_region
        %s156 = ssub.s32 %s18, 1
        %s157 = sand.u32 %s45, 1
        %s158 = scalar_lea.sflag [#allocation4], %s157
        %s159 = sand.u32 %s45, 1
        %s160 = smul.addr %s159, 8
        %s161 = scalar_lea.vmem [#allocation3], %s160
        // Predicated region
        $region25: #{tpu_custom_call.1} parent=23 // pred_check
          %p162 = pneg %p58
        $region26: #{tpu_custom_call.1} parent=23 // pred_check_branch
          %164 = sbr.rel (%p162) target = $region28
        $region27: #{tpu_custom_call.1} parent=23 // pred_region
          %165 = dma.done %s158, 128
        $region28: #{tpu_custom_call.1} parent=23 // pred_fallthru
          _
        %s166 = sand.u32 %s45, 1
        %s167 = scalar_lea.sflag [#allocation4], %s166
        %s168 = sand.u32 %s45, 1
        %s169 = smul.addr %s168, 8
        %s170 = scalar_lea.vmem [#allocation3], %s169
        %p171 = pneg %p58
        %p172 = pneg %p55
        %p173 = pneg %p86
        %p174 = pneg %p83
        %s175 = sand.u32 %s73, 1
        %s176 = scalar_lea.sflag [#allocation5], %s175
        %s177 = sand.u32 %s73, 1
        %s178 = smul.addr %s177, 8
        %s179 = scalar_lea.vmem [#allocation6], %s178
        %p180 = pneg %p112
        %p181 = pneg %p109
        %s182 = sand.u32 %s99, 1
        %s183 = scalar_lea.sflag [#allocation8], %s182
        %s184 = sand.u32 %s99, 1
        %s185 = scalar_lea.vmem [#allocation7], %s184
        %v186 = vld [vmem:[%s161] sm:$0xff]
        %v187 = vand.u32 2147483647, %v186
        %v188 = vsub.f32 0.0, %v187
        %v189 = vmul.f32 %v188, 1.442695
        %v190 = vpow.pop %v189
        %v191 = vadd.f32 %v190, 1.0
        %v192 = vrcp.pop %v191
        %v193 = vmul.f32 %v191, %v192
        %v194 = vsub.f32 2.0, %v193
        %v195 = vmul.f32 %v192, %v194
        %v196 = vmul.f32 %v191, %v195
        %v197 = vsub.f32 2.0, %v196
        %v198 = vmul.f32 %v195, %v197
        %vm199 = vcmp.ge.f32.partialorder %v186, 0.0
        %v200 = vsel %vm199, 1.0, %v190
        %v201 = vmul.f32 %v200, %v198
        %202 = vst [vmem:[%s179] sm:$0xff] %v201
        %v203 = vlog2.pop %v191
        %v204 = vmul.f32 %v203, 0.6931472
        %v205 = vmul.f32 %v204, 2.0
        %v206 = vadd.f32 %v187, %v205
        %p207 = scmp.eq.s32.totalorder %s28, 0
        // Predicated region
        $region29: #{tpu_custom_call.1} parent=23 // pred_check
          %p208 = pneg %p207
        $region30: #{tpu_custom_call.1} parent=23 // pred_check_branch
          %210 = sbr.rel (%p208) target = $region32
        $region31: #{tpu_custom_call.1} parent=23 // pred_region
          %211 = vst [vmem:[#allocation2] sm:$0xff] 0.0
        $region32: #{tpu_custom_call.1} parent=23 // pred_fallthru
          _
        %v212 = vld [vmem:[#allocation2] sm:$0xff]
        %v213 = vadd.f32 %v206, 0.0
        %v214 = vadd.f32 %v212, %v213
        %215 = vst [vmem:[#allocation2] sm:$0xff] %v214
        // Predicated region
        $region33: #{tpu_custom_call.1} parent=23 // pred_check
          %p216 = pneg %p207
        $region34: #{tpu_custom_call.1} parent=23 // pred_check_branch
          %218 = sbr.rel (%p216) target = $region36
        $region35: #{tpu_custom_call.1} parent=23 // pred_region
          %v219 = vld [vmem:[#allocation2] sm:$0xff]
          %v220 = vrot.slane %v219, 4
          %v221 = vadd.f32 %v219, %v220
          %v222 = vrot.slane %v221, 2
          %v223 = vadd.f32 %v221, %v222
          %v224 = vrot.slane %v223, 1
          %v225 = vadd.f32 %v223, %v224
          %v226 = vsub.f32 0.0, %v225
          %227 = vst [vmem:[%s185] sm:$0x1] %v226
        $region36: #{tpu_custom_call.1} parent=23 // pred_fallthru
          _
        %s228 = sand.u32 %s73, 1
        %s229 = scalar_lea.sflag [#allocation5], %s228
        %s230 = sand.u32 %s73, 1
        %s231 = smul.addr %s230, 8
        %s232 = scalar_lea.vmem [#allocation6], %s231
        %s233 = sand.u32 %s99, 1
        %s234 = scalar_lea.sflag [#allocation8], %s233
        %s235 = sand.u32 %s99, 1
        %s236 = scalar_lea.vmem [#allocation7], %s235
        // Predicated region
        $region37: #{tpu_custom_call.1} parent=23 // pred_check
          %p237 = pneg %p83
        $region38: #{tpu_custom_call.1} parent=23 // pred_check_branch
          %239 = sbr.rel (%p237) target = $region40
        $region39: #{tpu_custom_call.1} parent=23 // pred_region
          %s241 = ssub.s32 128, 128
          %242 = vsyncadd %s229, %s241
          %s243 = sadd.s32 %s28, %s27
          %s244 = smul.addr %s243, 128
          %s245 = scalar_lea.hbm %s1, %s244
          %s247 = sshll.u32 %s232, 4
          %s248 = int_to_ptr.vmem [resolvable:$true] %s247
          %250 = dma.vmem_to_hbm [thread:$0]  %s248, 128, %s245, %s229
        $region40: #{tpu_custom_call.1} parent=23 // pred_fallthru
          _
        // Predicated region
        $region41: #{tpu_custom_call.1} parent=23 // pred_check
          %p251 = pneg %p109
        $region42: #{tpu_custom_call.1} parent=23 // pred_check_branch
          %253 = sbr.rel (%p251) target = $region44
        $region43: #{tpu_custom_call.1} parent=23 // pred_region
          %s255 = ssub.s32 16, 16
          %256 = vsyncadd %s234, %s255
          %s257 = smul.addr %s27, 16
          %s258 = scalar_lea.hbm %s2, %s257
          %s260 = sshll.u32 %s236, 4
          %s261 = int_to_ptr.vmem [resolvable:$true] %s260
          %263 = dma.vmem_to_hbm [thread:$0]  %s261, 16, %s258, %s234
        $region44: #{tpu_custom_call.1} parent=23 // pred_fallthru
          _
      $region24: #{tpu_custom_call.1} parent=5 // pred_fallthru
        _
      %p264 = scmp.le.s32.totalorder 2, %s18
      // Predicated region
      $region45: #{tpu_custom_call.1} parent=5 // pred_check
        %p265 = pneg %p264
      $region46: #{tpu_custom_call.1} parent=5 // pred_check_branch
        %267 = sbr.rel (%p265) target = $region48
      $region47: #{tpu_custom_call.1} parent=5 // pred_region
        %s268 = ssub.s32 %s18, 2
        // Predicated region
        $region49: #{tpu_custom_call.1} parent=47 // pred_check
          %p269 = pneg %p89
        $region50: #{tpu_custom_call.1} parent=47 // pred_check_branch
          %271 = sbr.rel (%p269) target = $region52
        $region51: #{tpu_custom_call.1} parent=47 // pred_region
          %s272 = sand.u32 %s74, 1
          %s273 = scalar_lea.sflag [#allocation5], %s272
          %s274 = sand.u32 %s74, 1
          %s275 = smul.addr %s274, 8
          %s276 = scalar_lea.vmem [#allocation6], %s275
          %277 = dma.done %s273, 128
        $region52: #{tpu_custom_call.1} parent=47 // pred_fallthru
          _
        // Predicated region
        $region53: #{tpu_custom_call.1} parent=47 // pred_check
          %p278 = pneg %p115
        $region54: #{tpu_custom_call.1} parent=47 // pred_check_branch
          %280 = sbr.rel (%p278) target = $region56
        $region55: #{tpu_custom_call.1} parent=47 // pred_region
          %s281 = sand.u32 %s100, 1
          %s282 = scalar_lea.sflag [#allocation8], %s281
          %s283 = sand.u32 %s100, 1
          %s284 = scalar_lea.vmem [#allocation7], %s283
          %285 = dma.done %s282, 16
        $region56: #{tpu_custom_call.1} parent=47 // pred_fallthru
          _
      $region48: #{tpu_custom_call.1} parent=5 // pred_fallthru
        _
    $region6: #{tpu_custom_call.1} parent=1 // loop_footer
      %s22 = sadd.s32 1, %s18
    $region7: #{tpu_custom_call.1} parent=1 // loop_footer_branch
      %17 = sbr.rel target = $region3
    $region8: #{tpu_custom_call.1} parent=1 // loop_exit
      _
    %286 = vsyncpa [#allocation4], 1
    %s287 = scalar_lea.sflag [#allocation4], 1
    %288 = vsyncpa %s287, 1
    %289 = vsyncpa [#allocation5], 1
    %s290 = scalar_lea.sflag [#allocation5], 1
    %291 = vsyncpa %s290, 1
    %292 = vsyncpa [#allocation8], 1
    %s293 = scalar_lea.sflag [#allocation8], 1
    %294 = vsyncpa %s293, 1

</llo_original>
